<compile_context>
chip_gen: v7x
topology: tpu7x:2x2x1
jax: 0.10.0
libtpu: 0.0.40
codegen_flags: <defaults>
</compile_context>

<pallas_src>
import jax
import jax.numpy as jnp
from jax.experimental import pallas as pl
from jax.experimental.pallas import tpu as pltpu


# ---------------------------------------------------------------------------
# VMEM budget / tiling helpers
# ---------------------------------------------------------------------------
def _vmem_limit_bytes():
    """3/4 of physical VMEM (leaves double-buffer headroom): ~48 MiB on v7x,
    96 MiB on v5e/v6e.  Falls back to a v7x-safe value if the query fails."""
    cap = 64 * 1024 * 1024
    try:
        info = pltpu.get_tpu_info()
        cap = int(getattr(info, "vmem_capacity_bytes", cap) or cap)
    except Exception:
        pass
    return int(cap * 3 // 4)


def _row_tile(m, s, itemsize, budget_bytes):
    """Pick a row-tile R that divides M, is a multiple of 8 (sublane), and keeps
    the double-buffered in+out tiles under `budget_bytes`.  Falls back to the
    full extent (always legal for BlockSpec) when M isn't sublane-aligned."""
    if m % 8 != 0:
        return m
    # 2 input buffers + 2 output buffers per row, itemsize bytes each.
    max_rows = budget_bytes // max(1, 4 * s * itemsize)
    max_rows = max(8, (max_rows // 8) * 8)
    if m <= max_rows:
        return m
    for cand in range(min(m, max_rows), 7, -8):
        if m % cand == 0:
            return cand
    return m


# ---------------------------------------------------------------------------
# Pallas kernels
# ---------------------------------------------------------------------------
def _bn_row_stats_kernel(x_ref, mean_ref, m2_ref):
    """Per-row (one row = one (n, c) pair) mean and centered sum of squares."""
    x = x_ref[...].astype(jnp.float32)                       # (R, S)
    inv_s = 1.0 / x.shape[1]
    mean = jnp.sum(x, axis=1, keepdims=True) * inv_s         # (R, 1)
    d = x - mean
    m2 = jnp.sum(d * d, axis=1, keepdims=True)               # (R, 1)
    mean_ref[...] = mean
    m2_ref[...] = m2


def _bn_relu_apply_kernel(x_ref, scale_ref, shift_ref, o_ref):
    """Fused normalize + affine + ReLU: y = max(x*scale + shift, 0)."""
    x = x_ref[...].astype(jnp.float32)                       # (R, S)
    y = x * scale_ref[...] + shift_ref[...]                  # per-row broadcast
    o_ref[...] = jnp.maximum(y, 0.0).astype(o_ref.dtype)


# ---------------------------------------------------------------------------
# Wrapper: BatchNorm2d (training stats) + ReLU on NCHW input
# ---------------------------------------------------------------------------
def batchnorm_relu(x, gamma, beta, eps=1e-5):
    N, C, H, W = x.shape
    M, S = N * C, H * W
    xf = x.reshape(M, S)                                     # free reshape (NCHW)

    vmem_limit = _vmem_limit_bytes()
    tile_budget = min(vmem_limit // 2, 16 * 1024 * 1024)
    R = _row_tile(M, S, xf.dtype.itemsize, tile_budget)
    grid = (M // R,)
    cparams = pltpu.CompilerParams(
        dimension_semantics=("parallel",),
        vmem_limit_bytes=vmem_limit,
    )

    # --- Pass 1: per-(n, c) row statistics (tiled, pipelined) ---------------
    row_mean, row_m2 = pl.pallas_call(
        _bn_row_stats_kernel,
        out_shape=(
            jax.ShapeDtypeStruct((M, 1), jnp.float32),
            jax.ShapeDtypeStruct((M, 1), jnp.float32),
        ),
        grid=grid,
        in_specs=[pl.BlockSpec((R, S), lambda i: (i, 0))],
        out_specs=(
            pl.BlockSpec((R, 1), lambda i: (i, 0)),
            pl.BlockSpec((R, 1), lambda i: (i, 0)),
        ),
        compiler_params=cparams,
    )(xf)

    # --- Tiny per-channel combine over the batch (O(N*C) scalars) -----------
    # Numerically stable pooled mean / M2 (Chan's parallel combination):
    #   pooled_M2 = sum(M2_n) + S * sum((mean_n - pooled_mean)^2)
    rm = row_mean.reshape(N, C)
    rm2 = row_m2.reshape(N, C)
    ch_mean = jnp.mean(rm, axis=0)                                    # (C,)
    ch_m2 = jnp.sum(rm2, axis=0) + S * jnp.sum((rm - ch_mean) ** 2, axis=0)
    var = ch_m2 / (N * S)                                             # biased (PyTorch)
    scale_c = gamma.astype(jnp.float32) * jax.lax.rsqrt(var + eps)    # (C,)
    shift_c = beta.astype(jnp.float32) - ch_mean * scale_c            # (C,)
    scale_r = jnp.tile(scale_c, (N,)).reshape(M, 1)                   # row n*C+c -> c
    shift_r = jnp.tile(shift_c, (N,)).reshape(M, 1)

    # --- Pass 2: fused normalize + affine + ReLU (tiled, pipelined) ---------
    out = pl.pallas_call(
        _bn_relu_apply_kernel,
        out_shape=jax.ShapeDtypeStruct((M, S), x.dtype),
        grid=grid,
        in_specs=[
            pl.BlockSpec((R, S), lambda i: (i, 0)),
            pl.BlockSpec((R, 1), lambda i: (i, 0)),
            pl.BlockSpec((R, 1), lambda i: (i, 0)),
        ],
        out_specs=pl.BlockSpec((R, S), lambda i: (i, 0)),
        compiler_params=cparams,
    )(xf, scale_r, shift_r)
    return out.reshape(N, C, H, W)


# ---------------------------------------------------------------------------
# Pure-JAX reference (PyTorch training-mode BatchNorm2d + ReLU semantics)
# ---------------------------------------------------------------------------
def batchnorm_relu_ref(x, gamma, beta, eps=1e-5):
    mean = jnp.mean(x, axis=(0, 2, 3), keepdims=True)
    var = jnp.mean((x - mean) ** 2, axis=(0, 2, 3), keepdims=True)   # biased
    y = (x - mean) * jax.lax.rsqrt(var + eps)
    y = y * gamma.reshape(1, -1, 1, 1) + beta.reshape(1, -1, 1, 1)
    return jnp.maximum(y, 0.0)


# ---------------------------------------------------------------------------
if __name__ == "__main__":
    key = jax.random.PRNGKey(0)
    kx, kg, kb = jax.random.split(key, 3)

    N, C, H, W = 2, 4, 16, 16
    x = 2.0 * jax.random.normal(kx, (N, C, H, W), jnp.float32) + 0.5
    gamma = 1.0 + 0.1 * jax.random.normal(kg, (C,), jnp.float32)
    beta = 0.1 * jax.random.normal(kb, (C,), jnp.float32)

    fwd = jax.jit(batchnorm_relu)
    out = jax.block_until_ready(fwd(x, gamma, beta))
    ref = batchnorm_relu_ref(x, gamma, beta)

    assert out.shape == (N, C, H, W), out.shape
    assert bool(jnp.all(jnp.isfinite(out)))
    assert bool(jnp.allclose(out, ref, atol=1e-5, rtol=1e-5)), float(
        jnp.max(jnp.abs(out - ref)))
    print("KERNEL_OK")
</pallas_src>

<mosaic_0001>
module attributes {stable_mosaic.version = 11 : i64} {
  func.func @_bn_row_stats_kernel(%arg0: i32, %arg1: memref<8x256xf32, #tpu.memory_space<vmem>>, %arg2: memref<8x1xf32, #tpu.memory_space<vmem>>, %arg3: memref<8x1xf32, #tpu.memory_space<vmem>>) attributes {dimension_semantics = [#tpu.dimension_semantics<parallel>], iteration_bounds = array<i64: 1>, scalar_prefetch = 0 : i64, scratch_operands = 0 : i64, tpu.core_type = #tpu.core_type<tc>, window_params = [{transform_indices = @transform_0, window_bounds = array<i64: 8, 256>}, {transform_indices = @transform_1, window_bounds = array<i64: 8, 1>}, {transform_indices = @transform_2, window_bounds = array<i64: 8, 1>}]} {
    %c0 = arith.constant 0 : index
    %c0_0 = arith.constant 0 : index
    %0 = vector.load %arg1[%c0, %c0_0] : memref<8x256xf32, #tpu.memory_space<vmem>>, vector<8x256xf32>
    %cst = arith.constant dense<0.000000e+00> : vector<8xf32>
    %1 = vector.multi_reduction <add>, %0, %cst [1] : vector<8x256xf32> to vector<8xf32>
    %2 = vector.shape_cast %1 : vector<8xf32> to vector<8x1xf32>
    %cst_1 = arith.constant 3.906250e-03 : f32
    %3 = vector.broadcast %cst_1 : f32 to vector<8x1xf32>
    %4 = arith.mulf %2, %3 : vector<8x1xf32>
    %5 = vector.broadcast %4 : vector<8x1xf32> to vector<8x256xf32>
    %6 = arith.subf %0, %5 : vector<8x256xf32>
    %7 = arith.mulf %6, %6 : vector<8x256xf32>
    %cst_2 = arith.constant dense<0.000000e+00> : vector<8xf32>
    %8 = vector.multi_reduction <add>, %7, %cst_2 [1] : vector<8x256xf32> to vector<8xf32>
    %9 = vector.shape_cast %8 : vector<8xf32> to vector<8x1xf32>
    %c0_3 = arith.constant 0 : index
    %c0_4 = arith.constant 0 : index
    %10 = vector.load %arg2[%c0_3, %c0_4] : memref<8x1xf32, #tpu.memory_space<vmem>>, vector<8x1xf32>
    tpu.vector_store %arg2[%c0_3, %c0_4], %4 {strides = array<i32>} : memref<8x1xf32, #tpu.memory_space<vmem>>, vector<8x1xf32>,
    %c0_5 = arith.constant 0 : index
    %c0_6 = arith.constant 0 : index
    %11 = vector.load %arg3[%c0_5, %c0_6] : memref<8x1xf32, #tpu.memory_space<vmem>>, vector<8x1xf32>
    tpu.vector_store %arg3[%c0_5, %c0_6], %9 {strides = array<i32>} : memref<8x1xf32, #tpu.memory_space<vmem>>, vector<8x1xf32>,
    return
  }
  func.func @transform_0(%arg0: i32) -> (i32, i32) {
    %c0_i32 = arith.constant 0 : i32
    %c0_i32_0 = arith.constant 0 : i32
    return %arg0, %c0_i32 : i32, i32
  }
  func.func @transform_1(%arg0: i32) -> (i32, i32) {
    %c0_i32 = arith.constant 0 : i32
    %c0_i32_0 = arith.constant 0 : i32
    return %arg0, %c0_i32 : i32, i32
  }
  func.func @transform_2(%arg0: i32) -> (i32, i32) {
    %c0_i32 = arith.constant 0 : i32
    %c0_i32_0 = arith.constant 0 : i32
    return %arg0, %c0_i32 : i32, i32
  }
}

module attributes {stable_mosaic.version = 11 : i64} {
  func.func @_bn_relu_apply_kernel(%arg0: i32, %arg1: memref<8x256xf32, #tpu.memory_space<vmem>>, %arg2: memref<8x1xf32, #tpu.memory_space<vmem>>, %arg3: memref<8x1xf32, #tpu.memory_space<vmem>>, %arg4: memref<8x256xf32, #tpu.memory_space<vmem>>) attributes {dimension_semantics = [#tpu.dimension_semantics<parallel>], iteration_bounds = array<i64: 1>, scalar_prefetch = 0 : i64, scratch_operands = 0 : i64, tpu.core_type = #tpu.core_type<tc>, window_params = [{transform_indices = @transform_0, window_bounds = array<i64: 8, 256>}, {transform_indices = @transform_1, window_bounds = array<i64: 8, 1>}, {transform_indices = @transform_2, window_bounds = array<i64: 8, 1>}, {transform_indices = @transform_3, window_bounds = array<i64: 8, 256>}]} {
    %c0 = arith.constant 0 : index
    %c0_0 = arith.constant 0 : index
    %0 = vector.load %arg1[%c0, %c0_0] : memref<8x256xf32, #tpu.memory_space<vmem>>, vector<8x256xf32>
    %c0_1 = arith.constant 0 : index
    %c0_2 = arith.constant 0 : index
    %1 = vector.load %arg2[%c0_1, %c0_2] : memref<8x1xf32, #tpu.memory_space<vmem>>, vector<8x1xf32>
    %2 = vector.broadcast %1 : vector<8x1xf32> to vector<8x256xf32>
    %3 = arith.mulf %0, %2 : vector<8x256xf32>
    %c0_3 = arith.constant 0 : index
    %c0_4 = arith.constant 0 : index
    %4 = vector.load %arg3[%c0_3, %c0_4] : memref<8x1xf32, #tpu.memory_space<vmem>>, vector<8x1xf32>
    %5 = vector.broadcast %4 : vector<8x1xf32> to vector<8x256xf32>
    %6 = arith.addf %3, %5 : vector<8x256xf32>
    %cst = arith.constant 0.000000e+00 : f32
    %7 = vector.broadcast %cst : f32 to vector<8x256xf32>
    %8 = arith.maximumf %6, %7 : vector<8x256xf32>
    %c0_5 = arith.constant 0 : index
    %c0_6 = arith.constant 0 : index
    %9 = vector.load %arg4[%c0_5, %c0_6] : memref<8x256xf32, #tpu.memory_space<vmem>>, vector<8x256xf32>
    tpu.vector_store %arg4[%c0_5, %c0_6], %8 {strides = array<i32>} : memref<8x256xf32, #tpu.memory_space<vmem>>, vector<8x256xf32>,
    return
  }
  func.func @transform_0(%arg0: i32) -> (i32, i32) {
    %c0_i32 = arith.constant 0 : i32
    %c0_i32_0 = arith.constant 0 : i32
    return %arg0, %c0_i32 : i32, i32
  }
  func.func @transform_1(%arg0: i32) -> (i32, i32) {
    %c0_i32 = arith.constant 0 : i32
    %c0_i32_0 = arith.constant 0 : i32
    return %arg0, %c0_i32 : i32, i32
  }
  func.func @transform_2(%arg0: i32) -> (i32, i32) {
    %c0_i32 = arith.constant 0 : i32
    %c0_i32_0 = arith.constant 0 : i32
    return %arg0, %c0_i32 : i32, i32
  }
  func.func @transform_3(%arg0: i32) -> (i32, i32) {
    %c0_i32 = arith.constant 0 : i32
    %c0_i32_0 = arith.constant 0 : i32
    return %arg0, %c0_i32 : i32, i32
  }
}

</mosaic_0001>

<llo_original>
// kernel: tile.18
$region0: #{tile.18}
  #allocation0 [shape = 's32[1]{0}', space=sflag, size = 0x4, scoped, tag = 'scoped memory for tile.18']
  %s0 = inlined_call_operand.vmem [shape: f32[4], index: 0, kind: input, shape index: {}]
  %s1 = inlined_call_operand.vmem [shape: f32[2,4], index: 1, kind: output, shape index: {}]
  // Predicated region
  $region2: #{tile.18} parent=0 // pred_check
    _
  $region3: #{tile.18} parent=0 // pred_check_branch
    %3 = sbr.rel (0) target = $region5
  $region4: #{tile.18} parent=0 // pred_region
    _
  $region5: #{tile.18} parent=0 // pred_fallthru
    _
  %v4 = vld [vmem:[%s0] ss:$0 sm:$0xff]
  %5 = vst [vmem:[%s1] sm:$0x3] %v4

// kernel: tile.0
$region0: #{tile.0}
  %s0 = inlined_call_operand.vmem [shape: f32[2,4], index: 0, kind: input, shape index: {}]
  %s1 = inlined_call_operand.vmem [shape: f32[8,1], index: 1, kind: output, shape index: {}]
  $region1: #{tile.0} parent=0
    #allocation0 [shape = 'u8[4096]{0}', space=vmem, size = 0x1000, scoped, tag = 'scoped mem for input reshape']
    %s3 = sshllo.u32 0, 2
    %v4 = vld [vmem:[%s0] sm:%s3]
    %5 = vst [vmem:[#allocation0] sm:%s3] %v4
    %v6 = vld [vmem:[#allocation0] sm:$0x3]
    %vm7 = vcmask 7168
    %8 = vst.msk [vmem:[%s1] ss:$4 sm:$0x3] %vm7, %v6
    %v9 = vld [vmem:[#allocation0] sm:$0x3]
    %10 = vrot.lane.b32.xlu0 %v9, 127
    %v11 = vpop.permute.xlu0 %10
    %vm12 = vcmask 7168
    %s13 = scalar_lea.vmem %s1, 1
    %14 = vst.msk [vmem:[%s13] ss:$4 sm:$0x3] %vm12, %v11
    %v15 = vld [vmem:[#allocation0] sm:$0x3]
    %16 = vrot.lane.b32.xlu0 %v15, 126
    %v17 = vpop.permute.xlu0 %16
    %vm18 = vcmask 7168
    %s19 = scalar_lea.vmem %s1, 2
    %20 = vst.msk [vmem:[%s19] ss:$4 sm:$0x3] %vm18, %v17
    %v21 = vld [vmem:[#allocation0] sm:$0x3]
    %22 = vrot.lane.b32.xlu0 %v21, 125
    %v23 = vpop.permute.xlu0 %22
    %vm24 = vcmask 7168
    %s25 = scalar_lea.vmem %s1, 3
    %26 = vst.msk [vmem:[%s25] ss:$4 sm:$0x3] %vm24, %v23

// kernel: batchnorm_relu.2
$region0: #{batchnorm_relu.2}
  #allocation0 [shape = 'u32[]', space=smem, size = 0x4, offset = 0x4, fixed_abs, tag = 'smem constant byte address 0x4 - core index']
  #allocation1 [shape = 'u32[144,128]{1,0:T(1,128)}', space=vmem, size = 0x12000, scoped, tag = 'internal scratch']
  %s0 = inlined_call_operand.vmem [shape: f32[8,256], index: 0, kind: input, shape index: {}]
  %s1 = inlined_call_operand.vmem [shape: f32[8,1], index: 1, kind: output, shape index: {0}]
  %s2 = inlined_call_operand.vmem [shape: f32[8,1], index: 2, kind: output, shape index: {1}]
  %3 = xla_tuple %s1, %s2
  %s4 = sld [smem:[#allocation0]]
  $region22: #{batchnorm_relu.2} parent=0
    _
  %s6 = ssub.s32 1, %s4
  %s7 = scalar_select 0, %s6, %s4
  // Predicated region
  $region2: #{batchnorm_relu.2} parent=0 // pred_check
    _
  $region3: #{batchnorm_relu.2} parent=0 // pred_check_branch
    %9 = sbr.rel (0) target = $region5
  $region4: #{batchnorm_relu.2} parent=0 // pred_region
    _
  $region5: #{batchnorm_relu.2} parent=0 // pred_fallthru
    _
  %v10 = vld [vmem:[%s0] sm:$0xff]
  %v11 = vld [vmem:[%s0 + $0x8] sm:$0xff]
  %v12 = vadd.f32 %v10, %v11
  %13 = vadd.xlane.f32.xlu0 %v12
  %v14 = vpop.xlane.xlu0 %13
  %v15 = vmul.f32 %v14, 0.00390625
  %v16 = vsub.f32 %v10, %v15
  %v17 = vsub.f32 %v11, %v15
  %v18 = vmul.f32 %v16, %v16
  %v19 = vmul.f32 %v17, %v17
  %v20 = vadd.f32 %v18, %v19
  %21 = vadd.xlane.f32.xlu0 %v20
  %v22 = vpop.xlane.xlu0 %21
  %vm23 = vcmask 7168
  %24 = vst.msk [vmem:[%s1] sm:$0xff] %vm23, %v15
  %25 = vst.msk [vmem:[%s2] sm:$0xff] %vm23, %v22
  // Predicated region
  $region6: #{batchnorm_relu.2} parent=0 // pred_check
    _
  $region7: #{batchnorm_relu.2} parent=0 // pred_check_branch
    %27 = sbr.rel (0) target = $region9
  $region8: #{batchnorm_relu.2} parent=0 // pred_region
    _
  $region9: #{batchnorm_relu.2} parent=0 // pred_fallthru
    _
  // Predicated region
  $region10: #{batchnorm_relu.2} parent=0 // pred_check
    _
  $region11: #{batchnorm_relu.2} parent=0 // pred_check_branch
    %29 = sbr.rel (0) target = $region13
  $region12: #{batchnorm_relu.2} parent=0 // pred_region
    _
  $region13: #{batchnorm_relu.2} parent=0 // pred_fallthru
    _
  // Predicated region
  $region14: #{batchnorm_relu.2} parent=0 // pred_check
    _
  $region15: #{batchnorm_relu.2} parent=0 // pred_check_branch
    %31 = sbr.rel (0) target = $region17
  $region16: #{batchnorm_relu.2} parent=0 // pred_region
    _
  $region17: #{batchnorm_relu.2} parent=0 // pred_fallthru
    _
  // Predicated region
  $region18: #{batchnorm_relu.2} parent=0 // pred_check
    _
  $region19: #{batchnorm_relu.2} parent=0 // pred_check_branch
    %33 = sbr.rel (0) target = $region21
  $region20: #{batchnorm_relu.2} parent=0 // pred_region
    _
  $region21: #{batchnorm_relu.2} parent=0 // pred_fallthru
    _

// kernel: batchnorm_relu.3
$region0: #{batchnorm_relu.3}
  #allocation0 [shape = 'u32[]', space=smem, size = 0x4, offset = 0x4, fixed_abs, tag = 'smem constant byte address 0x4 - core index']
  #allocation1 [shape = 'u32[144,128]{1,0:T(1,128)}', space=vmem, size = 0x12000, scoped, tag = 'internal scratch']
  %s0 = inlined_call_operand.vmem [shape: f32[8,256], index: 0, kind: input, shape index: {}]
  %s1 = inlined_call_operand.vmem [shape: f32[8,1], index: 1, kind: input, shape index: {}]
  %s2 = inlined_call_operand.vmem [shape: f32[8,1], index: 2, kind: input, shape index: {}]
  %s3 = inlined_call_operand.vmem [shape: f32[8,256], index: 3, kind: output, shape index: {}]
  %s4 = sld [smem:[#allocation0]]
  $region22: #{batchnorm_relu.3} parent=0
    _
  %s6 = ssub.s32 1, %s4
  %s7 = scalar_select 0, %s6, %s4
  // Predicated region
  $region2: #{batchnorm_relu.3} parent=0 // pred_check
    _
  $region3: #{batchnorm_relu.3} parent=0 // pred_check_branch
    %9 = sbr.rel (0) target = $region5
  $region4: #{batchnorm_relu.3} parent=0 // pred_region
    _
  $region5: #{batchnorm_relu.3} parent=0 // pred_fallthru
    _
  // Predicated region
  $region6: #{batchnorm_relu.3} parent=0 // pred_check
    _
  $region7: #{batchnorm_relu.3} parent=0 // pred_check_branch
    %11 = sbr.rel (0) target = $region9
  $region8: #{batchnorm_relu.3} parent=0 // pred_region
    _
  $region9: #{batchnorm_relu.3} parent=0 // pred_fallthru
    _
  // Predicated region
  $region10: #{batchnorm_relu.3} parent=0 // pred_check
    _
  $region11: #{batchnorm_relu.3} parent=0 // pred_check_branch
    %13 = sbr.rel (0) target = $region13
  $region12: #{batchnorm_relu.3} parent=0 // pred_region
    _
  $region13: #{batchnorm_relu.3} parent=0 // pred_fallthru
    _
  %v14 = vld [vmem:[%s0] sm:$0xff]
  %v15 = vld [vmem:[%s0 + $0x8] sm:$0xff]
  %v16 = vld [vmem:[%s1] sm:$0xff]
  %18 = vset.pattern.permute.xlu0 0
  %19 = vperm.xlu0 %18, %v16
  %v20 = vpop.permute.xlu0 %19
  %v22 = vmul.f32 %v14, %v20
  %v23 = vmul.f32 %v15, %v20
  %v24 = vld [vmem:[%s2] sm:$0xff]
  %26 = vset.pattern.permute.xlu0 0
  %27 = vperm.xlu0 %26, %v24
  %v28 = vpop.permute.xlu0 %27
  %v30 = vadd.f32 %v22, %v28
  %v31 = vadd.f32 %v23, %v28
  %v32 = vmax.f32 %v30, 0.0
  %v33 = vmax.f32 %v31, 0.0
  %34 = vst [vmem:[%s3] sm:$0xff] %v32
  %35 = vst [vmem:[%s3 + $0x8] sm:$0xff] %v33
  // Predicated region
  $region14: #{batchnorm_relu.3} parent=0 // pred_check
    _
  $region15: #{batchnorm_relu.3} parent=0 // pred_check_branch
    %37 = sbr.rel (0) target = $region17
  $region16: #{batchnorm_relu.3} parent=0 // pred_region
    _
  $region17: #{batchnorm_relu.3} parent=0 // pred_fallthru
    _
  // Predicated region
  $region18: #{batchnorm_relu.3} parent=0 // pred_check
    _
  $region19: #{batchnorm_relu.3} parent=0 // pred_check_branch
    %39 = sbr.rel (0) target = $region21
  $region20: #{batchnorm_relu.3} parent=0 // pred_region
    _
  $region21: #{batchnorm_relu.3} parent=0 // pred_fallthru
    _

</llo_original>
